<compile_context>
chip_gen: v6e
topology: v6e:2x2x1
jax: 0.10.0
libtpu: 0.0.40
codegen_flags: <defaults>
</compile_context>

<pallas_src>
import functools

import jax
import jax.numpy as jnp
from jax.experimental import pallas as pl
from jax.experimental.pallas import tpu as pltpu


def classifier_kernel(fmap_ref, w_ref, b_ref, pred_ref, feat_ref):
    # fmap_ref: (TB, N, C) f32   backbone feature map tile, channels-last
    # w_ref:    (C, Kp)    f32   head weight (pre-transposed, class-padded)
    # b_ref:    (1, Kp)    f32   head bias (class-padded)
    # pred_ref: (TB, Kp)   f32
    # feat_ref: (TB, C)    f32
    x = fmap_ref[...]                                         # (TB, N, C)

    # Bottleneck: AdaptiveAvgPool2d((1,1)) + Flatten == mean over spatial (N).
    # C stays on the lane axis -> VPU adds + one sublane reduce, no relayout.
    inv_n = jnp.float32(1.0 / x.shape[1])                     # static constant
    feat = jnp.sum(x, axis=1) * inv_n                         # (TB, C)
    feat_ref[...] = feat

    # Head: Linear(features_dim, num_classes), f32 operands, f32 accumulation.
    pred = jnp.dot(feat, w_ref[...],
                   preferred_element_type=jnp.float32) + b_ref[...]
    pred_ref[...] = pred                                      # (TB, Kp)


def _round_up(x: int, m: int) -> int:
    return ((x + m - 1) // m) * m


def _pick_batch_tile(B: int, N: int, C: int,
                     target_bytes: int = 2 * 1024 * 1024) -> int:
    """Largest batch tile whose input block is ~target_bytes (f32)."""
    per_row = N * C * 4
    tb = max(1, target_bytes // per_row)
    if tb >= B:
        return B                      # single tile == full batch dim (legal block)
    return max(8, (tb // 8) * 8)      # multiple of 8 for clean (TB, C)/(TB, Kp) blocks


@functools.partial(jax.jit, static_argnames=())
def classifier_forward(feature_map, w_head, b_head):
    """feature_map: (B, C, H, W) f32 (backbone output, NCHW as in PyTorch).
       w_head: (K, C) f32, b_head: (K,) f32  (PyTorch nn.Linear layout).
       Returns (predictions (B, K), features (B, C))."""
    B, C, H, W = feature_map.shape
    K = w_head.shape[0]
    N = H * W

    # Channels-last for the kernel: (B, N, C).  (Ideally the backbone would
    # already emit NHWC; this transpose is plain XLA outside the kernel.)
    x = jnp.transpose(feature_map.reshape(B, C, N), (0, 2, 1))  # (B, N, C)

    # Pad num_classes to a lane multiple so the prediction output is lane-dense.
    Kp = _round_up(K, 128)
    w_t = jnp.zeros((C, Kp), jnp.float32).at[:, :K].set(jnp.transpose(w_head))
    b2 = jnp.zeros((1, Kp), jnp.float32).at[:, :K].set(b_head.astype(jnp.float32))

    # Batch tiling for DMA/compute overlap; pad B to a multiple of the tile.
    TB = _pick_batch_tile(B, N, C)
    Bp = _round_up(B, TB)
    if Bp != B:
        x = jnp.pad(x, ((0, Bp - B), (0, 0), (0, 0)))
    n_tiles = Bp // TB

    preds_p, feats_p = pl.pallas_call(
        classifier_kernel,
        out_shape=(jax.ShapeDtypeStruct((Bp, Kp), jnp.float32),
                   jax.ShapeDtypeStruct((Bp, C), jnp.float32)),
        grid_spec=pltpu.PrefetchScalarGridSpec(
            num_scalar_prefetch=0,
            grid=(n_tiles,),
            in_specs=[
                pl.BlockSpec((TB, N, C), lambda i: (i, 0, 0)),  # streamed fmap tile
                pl.BlockSpec((C, Kp), lambda i: (0, 0)),        # head weight (resident)
                pl.BlockSpec((1, Kp), lambda i: (0, 0)),        # head bias (resident)
            ],
            out_specs=[
                pl.BlockSpec((TB, Kp), lambda i: (i, 0)),       # predictions
                pl.BlockSpec((TB, C), lambda i: (i, 0)),        # pooled features
            ],
        ),
        compiler_params=pltpu.CompilerParams(
            dimension_semantics=("parallel",),                  # megacore on v7x
            vmem_limit_bytes=32 * 1024 * 1024,
        ),
    )(x, w_t, b2)

    return preds_p[:B, :K], feats_p[:B, :]


def classifier_reference(feature_map, w_head, b_head):
    """Pure-JAX reference mirroring the PyTorch forward (f32 throughout)."""
    f = jnp.mean(feature_map, axis=(2, 3))                    # (B, C)
    preds = f @ w_head.T + b_head[None, :]                    # (B, K)
    return preds, f


if __name__ == "__main__":
    key = jax.random.PRNGKey(0)
    # Backbone feature-map sized demo: B=2, out_features C=128, 8x8 spatial,
    # num_classes K=10 (exercises the lane-padding path: K -> 128).
    B, C, H, W, K = 2, 128, 8, 8, 10

    ks = jax.random.split(key, 3)
    feature_map = jax.random.normal(ks[0], (B, C, H, W), jnp.float32)
    w_head = jax.random.normal(ks[1], (K, C), jnp.float32) * 0.05
    b_head = jax.random.normal(ks[2], (K,), jnp.float32) * 0.05

    preds, feats = classifier_forward(feature_map, w_head, b_head)
    preds = jax.block_until_ready(preds)
    feats = jax.block_until_ready(feats)

    preds_ref, feats_ref = classifier_reference(feature_map, w_head, b_head)

    assert preds.shape == (B, K) and feats.shape == (B, C)
    # Entire path is f32 -> tight tolerances.
    assert jnp.allclose(feats, feats_ref, rtol=1e-5, atol=1e-5), "features mismatch"
    assert jnp.allclose(preds, preds_ref, rtol=1e-5, atol=1e-5), "predictions mismatch"

    print("KERNEL_OK")
</pallas_src>

<mosaic_0001>
module attributes {stable_mosaic.version = 11 : i64} {
  func.func @classifier_kernel(%arg0: i32, %arg1: memref<2x64x128xf32, #tpu.memory_space<vmem>>, %arg2: memref<128x128xf32, #tpu.memory_space<vmem>>, %arg3: memref<1x128xf32, #tpu.memory_space<vmem>>, %arg4: memref<2x128xf32, #tpu.memory_space<vmem>>, %arg5: memref<2x128xf32, #tpu.memory_space<vmem>>) attributes {dimension_semantics = [#tpu.dimension_semantics<parallel>], iteration_bounds = array<i64: 1>, scalar_prefetch = 0 : i64, scratch_operands = 0 : i64, tpu.core_type = #tpu.core_type<tc>, window_params = [{transform_indices = @transform_0, window_bounds = array<i64: 2, 64, 128>}, {pipeline_mode = #tpu.pipeline_mode<synchronous>, transform_indices = @transform_1, window_bounds = array<i64: 128, 128>}, {pipeline_mode = #tpu.pipeline_mode<synchronous>, transform_indices = @transform_2, window_bounds = array<i64: 1, 128>}, {transform_indices = @transform_3, window_bounds = array<i64: 2, 128>}, {transform_indices = @transform_4, window_bounds = array<i64: 2, 128>}]} {
    %c0 = arith.constant 0 : index
    %c0_0 = arith.constant 0 : index
    %c0_1 = arith.constant 0 : index
    %0 = vector.load %arg1[%c0, %c0_0, %c0_1] : memref<2x64x128xf32, #tpu.memory_space<vmem>>, vector<2x64x128xf32>
    %cst = arith.constant dense<0.000000e+00> : vector<2x128xf32>
    %1 = vector.multi_reduction <add>, %0, %cst [1] : vector<2x64x128xf32> to vector<2x128xf32>
    %cst_2 = arith.constant 1.562500e-02 : f32
    %2 = vector.broadcast %cst_2 : f32 to vector<2x128xf32>
    %3 = arith.mulf %1, %2 : vector<2x128xf32>
    %c0_3 = arith.constant 0 : index
    %c0_4 = arith.constant 0 : index
    %4 = vector.load %arg5[%c0_3, %c0_4] : memref<2x128xf32, #tpu.memory_space<vmem>>, vector<2x128xf32>
    tpu.vector_store %arg5[%c0_3, %c0_4], %3 {strides = array<i32>} : memref<2x128xf32, #tpu.memory_space<vmem>>, vector<2x128xf32>,
    %c0_5 = arith.constant 0 : index
    %c0_6 = arith.constant 0 : index
    %5 = vector.load %arg2[%c0_5, %c0_6] : memref<128x128xf32, #tpu.memory_space<vmem>>, vector<128x128xf32>
    %cst_7 = arith.constant dense<0.000000e+00> : vector<2x128xf32>
    %6 = tpu.matmul %3, %5, %cst_7 {dimension_numbers = #tpu.dot_dimension_numbers<[1], [0], [0], [1], [0, 0, 1, 1], [], []>} : vector<2x128xf32>, vector<128x128xf32>, vector<2x128xf32> -> vector<2x128xf32>
    %c0_8 = arith.constant 0 : index
    %c0_9 = arith.constant 0 : index
    %7 = vector.load %arg3[%c0_8, %c0_9] : memref<1x128xf32, #tpu.memory_space<vmem>>, vector<1x128xf32>
    %8 = vector.broadcast %7 : vector<1x128xf32> to vector<2x128xf32>
    %9 = arith.addf %6, %8 : vector<2x128xf32>
    %c0_10 = arith.constant 0 : index
    %c0_11 = arith.constant 0 : index
    %10 = vector.load %arg4[%c0_10, %c0_11] : memref<2x128xf32, #tpu.memory_space<vmem>>, vector<2x128xf32>
    tpu.vector_store %arg4[%c0_10, %c0_11], %9 {strides = array<i32>} : memref<2x128xf32, #tpu.memory_space<vmem>>, vector<2x128xf32>,
    return
  }
  func.func @transform_0(%arg0: i32) -> (i32, i32, i32) {
    %c0_i32 = arith.constant 0 : i32
    %c0_i32_0 = arith.constant 0 : i32
    %c0_i32_1 = arith.constant 0 : i32
    return %arg0, %c0_i32, %c0_i32_0 : i32, i32, i32
  }
  func.func @transform_1(%arg0: i32) -> (i32, i32) {
    %c0_i32 = arith.constant 0 : i32
    %c0_i32_0 = arith.constant 0 : i32
    %c0_i32_1 = arith.constant 0 : i32
    return %c0_i32, %c0_i32_0 : i32, i32
  }
  func.func @transform_2(%arg0: i32) -> (i32, i32) {
    %c0_i32 = arith.constant 0 : i32
    %c0_i32_0 = arith.constant 0 : i32
    %c0_i32_1 = arith.constant 0 : i32
    return %c0_i32, %c0_i32_0 : i32, i32
  }
  func.func @transform_3(%arg0: i32) -> (i32, i32) {
    %c0_i32 = arith.constant 0 : i32
    %c0_i32_0 = arith.constant 0 : i32
    return %arg0, %c0_i32 : i32, i32
  }
  func.func @transform_4(%arg0: i32) -> (i32, i32) {
    %c0_i32 = arith.constant 0 : i32
    %c0_i32_0 = arith.constant 0 : i32
    return %arg0, %c0_i32 : i32, i32
  }
}

</mosaic_0001>

<llo_original>
// kernel: classifier_forward.1
$region0: #{classifier_forward.1}
  #allocation0 [shape = 'u32[]', space=smem, size = 0x4, offset = 0x4, fixed_abs, tag = 'smem constant byte address 0x4 - core index']
  #allocation1 [shape = 'u32[144,128]{1,0:T(1,128)}', space=vmem, size = 0x12000, scoped, tag = 'internal scratch']
  %s0 = inlined_call_operand.vmem [shape: f32[2,64,128], index: 0, kind: input, shape index: {}]
  %s1 = inlined_call_operand.vmem [shape: f32[128,128], index: 1, kind: input, shape index: {}]
  %s2 = inlined_call_operand.vmem [shape: f32[1,128], index: 2, kind: input, shape index: {}]
  %s3 = inlined_call_operand.hbm [shape: f32[2,128], index: 3, kind: output, shape index: {0}]
  %s4 = inlined_call_operand.hbm [shape: f32[2,128], index: 4, kind: output, shape index: {1}]
  %5 = xla_tuple %s3, %s4
  %s6 = sld [smem:[#allocation0]]
  $region30: #{classifier_forward.1} parent=0
    _
  %s8 = ssub.s32 1, %s6
  %s9 = scalar_select 0, %s8, %s6
  $region1: #{classifier_forward.1} parent=0
    #allocation2 [shape = 'u8[1024]{0}', space=vmem, size = 0x400, scoped, tag = 'output window, operand 0, single buffered']
    #allocation3 [shape = 's32[1]{0}', space=sflag, size = 0x4, scoped, tag = 'scoped memory for classifier_forward.1']
    #allocation4 [shape = 'u8[1024]{0}', space=vmem, size = 0x400, scoped, tag = 'output window, operand 1, single buffered']
    #allocation5 [shape = 's32[1]{0}', space=sflag, size = 0x4, scoped, tag = 'scoped memory for classifier_forward.1']
    %10 = vsyncpa [#allocation3], 0
    %11 = vsyncpa [#allocation5], 0
    // Predicated region
    $region2: #{classifier_forward.1} parent=1 // pred_check
      _
    $region3: #{classifier_forward.1} parent=1 // pred_check_branch
      %13 = sbr.rel (0) target = $region5
    $region4: #{classifier_forward.1} parent=1 // pred_region
      _
    $region5: #{classifier_forward.1} parent=1 // pred_fallthru
      _
    // Predicated region
    $region6: #{classifier_forward.1} parent=1 // pred_check
      _
    $region7: #{classifier_forward.1} parent=1 // pred_check_branch
      %15 = sbr.rel (0) target = $region9
    $region8: #{classifier_forward.1} parent=1 // pred_region
      _
    $region9: #{classifier_forward.1} parent=1 // pred_fallthru
      _
    // Predicated region
    $region10: #{classifier_forward.1} parent=1 // pred_check
      _
    $region11: #{classifier_forward.1} parent=1 // pred_check_branch
      %17 = sbr.rel (0) target = $region13
    $region12: #{classifier_forward.1} parent=1 // pred_region
      _
    $region13: #{classifier_forward.1} parent=1 // pred_fallthru
      _
    %v18 = vld [vmem:[%s0] sm:$0xff]
    %v19 = vld [vmem:[%s0 + $0x8] sm:$0xff]
    %v20 = vld [vmem:[%s0 + $0x10] sm:$0xff]
    %v21 = vld [vmem:[%s0 + $0x18] sm:$0xff]
    %v22 = vld [vmem:[%s0 + $0x20] sm:$0xff]
    %v23 = vld [vmem:[%s0 + $0x28] sm:$0xff]
    %v24 = vld [vmem:[%s0 + $0x30] sm:$0xff]
    %v25 = vld [vmem:[%s0 + $0x38] sm:$0xff]
    %v26 = vld [vmem:[%s0 + $0x40] sm:$0xff]
    %v27 = vld [vmem:[%s0 + $0x48] sm:$0xff]
    %v28 = vld [vmem:[%s0 + $0x50] sm:$0xff]
    %v29 = vld [vmem:[%s0 + $0x58] sm:$0xff]
    %v30 = vld [vmem:[%s0 + $0x60] sm:$0xff]
    %v31 = vld [vmem:[%s0 + $0x68] sm:$0xff]
    %v32 = vld [vmem:[%s0 + $0x70] sm:$0xff]
    %v33 = vld [vmem:[%s0 + $0x78] sm:$0xff]
    %v34 = vadd.f32 %v18, %v19
    %v35 = vadd.f32 %v34, %v20
    %v36 = vadd.f32 %v35, %v21
    %v37 = vadd.f32 %v36, %v22
    %v38 = vadd.f32 %v37, %v23
    %v39 = vadd.f32 %v38, %v24
    %v40 = vadd.f32 %v39, %v25
    %v41 = vrot.slane %v40, 4
    %v42 = vadd.f32 %v40, %v41
    %v43 = vrot.slane %v42, 2
    %v44 = vadd.f32 %v42, %v43
    %v45 = vrot.slane %v44, 1
    %v46 = vadd.f32 %v44, %v45
    %v47 = vadd.f32 %v26, %v27
    %v48 = vadd.f32 %v47, %v28
    %v49 = vadd.f32 %v48, %v29
    %v50 = vadd.f32 %v49, %v30
    %v51 = vadd.f32 %v50, %v31
    %v52 = vadd.f32 %v51, %v32
    %v53 = vadd.f32 %v52, %v33
    %v54 = vrot.slane %v53, 4
    %v55 = vadd.f32 %v53, %v54
    %v56 = vrot.slane %v55, 2
    %v57 = vadd.f32 %v55, %v56
    %v58 = vrot.slane %v57, 1
    %v59 = vadd.f32 %v57, %v58
    %v60 = vmul.f32 %v46, 0.015625
    %v61 = vmul.f32 %v59, 0.015625
    %vm64 = vcmask 1041409
    %v65 = vsel %vm64, %v61, %v60
    %67 = vst [vmem:[#allocation4] sm:$0x3] %v65
    %v68 = vld [vmem:[%s1] sm:$0xff]
    %v69 = vld [vmem:[%s1 + $0x8] sm:$0xff]
    %v70 = vld [vmem:[%s1 + $0x10] sm:$0xff]
    %v71 = vld [vmem:[%s1 + $0x18] sm:$0xff]
    %v72 = vld [vmem:[%s1 + $0x20] sm:$0xff]
    %v73 = vld [vmem:[%s1 + $0x28] sm:$0xff]
    %v74 = vld [vmem:[%s1 + $0x30] sm:$0xff]
    %v75 = vld [vmem:[%s1 + $0x38] sm:$0xff]
    %v76 = vld [vmem:[%s1 + $0x40] sm:$0xff]
    %v77 = vld [vmem:[%s1 + $0x48] sm:$0xff]
    %v78 = vld [vmem:[%s1 + $0x50] sm:$0xff]
    %v79 = vld [vmem:[%s1 + $0x58] sm:$0xff]
    %v80 = vld [vmem:[%s1 + $0x60] sm:$0xff]
    %v81 = vld [vmem:[%s1 + $0x68] sm:$0xff]
    %v82 = vld [vmem:[%s1 + $0x70] sm:$0xff]
    %v83 = vld [vmem:[%s1 + $0x78] sm:$0xff]
    %v84 = vld [vmem:[%s2] sm:$0x1]
    %v86 = vlaneseq
    %v87 = vshrl.u32 %v86, 7
    %v88 = vsub.s32 0, %v87
    %v89 = vrot.slane %v84, %v88
    %91 = vmatprep.subr.mxu0 0.0
    %92 = vmatpush1.msra.mxu0 %v83
    %93 = vmatprep.subr.mxu0 0.0
    %94 = vmatpush1.msra.mxu0 %v82
    %95 = vmatprep.subr.mxu0 0.0
    %96 = vmatpush1.msra.mxu0 %v81
    %97 = vmatprep.subr.mxu0 0.0
    %98 = vmatpush1.msra.mxu0 %v80
    %99 = vmatprep.subr.mxu0 0.0
    %100 = vmatpush1.msra.mxu0 %v79
    %101 = vmatprep.subr.mxu0 0.0
    %102 = vmatpush1.msra.mxu0 %v78
    %103 = vmatprep.subr.mxu0 0.0
    %104 = vmatpush1.msra.mxu0 %v77
    %105 = vmatprep.subr.mxu0 0.0
    %106 = vmatpush1.msra.mxu0 %v76
    %107 = vmatprep.subr.mxu0 0.0
    %108 = vmatpush1.msra.mxu0 %v75
    %109 = vmatprep.subr.mxu0 0.0
    %110 = vmatpush1.msra.mxu0 %v74
    %111 = vmatprep.subr.mxu0 0.0
    %112 = vmatpush1.msra.mxu0 %v73
    %113 = vmatprep.subr.mxu0 0.0
    %114 = vmatpush1.msra.mxu0 %v72
    %115 = vmatprep.subr.mxu0 0.0
    %116 = vmatpush1.msra.mxu0 %v71
    %117 = vmatprep.subr.mxu0 0.0
    %118 = vmatpush1.msra.mxu0 %v70
    %119 = vmatprep.subr.mxu0 0.0
    %120 = vmatpush1.msra.mxu0 %v69
    %121 = vmatprep.subr.mxu0 0.0
    %122 = vmatpush1.msra.mxu0 %v68
    %123 = vmatprep.subr.mxu0 0.0
    %124 = vmatpush2.msra.mxu0 0.0
    %125 = vmatprep.subr.mxu0 0.0
    %126 = vmatpush2.msra.mxu0 0.0
    %127 = vmatprep.subr.mxu0 0.0
    %128 = vmatpush2.msra.mxu0 0.0
    %129 = vmatprep.subr.mxu0 0.0
    %130 = vmatpush2.msra.mxu0 0.0
    %131 = vmatprep.subr.mxu0 0.0
    %132 = vmatpush2.msra.mxu0 0.0
    %133 = vmatprep.subr.mxu0 0.0
    %134 = vmatpush2.msra.mxu0 0.0
    %135 = vmatprep.subr.mxu0 0.0
    %136 = vmatpush2.msra.mxu0 0.0
    %137 = vmatprep.subr.mxu0 0.0
    %138 = vmatpush2.msra.mxu0 0.0
    %139 = vmatprep.subr.mxu0 0.0
    %140 = vmatpush2.msra.mxu0 0.0
    %141 = vmatprep.subr.mxu0 0.0
    %142 = vmatpush2.msra.mxu0 0.0
    %143 = vmatprep.subr.mxu0 0.0
    %144 = vmatpush2.msra.mxu0 0.0
    %145 = vmatprep.subr.mxu0 0.0
    %146 = vmatpush2.msra.mxu0 0.0
    %147 = vmatprep.subr.mxu0 0.0
    %148 = vmatpush2.msra.mxu0 0.0
    %149 = vmatprep.subr.mxu0 0.0
    %150 = vmatpush2.msra.mxu0 0.0
    %151 = vmatprep.subr.mxu0 0.0
    %152 = vmatpush2.msra.mxu0 0.0
    %153 = vmatprep.subr.mxu0 0.0
    %154 = vmatpush2.msra.mxu0 0.0
    %155 = vmatprep.mubr.f32.mxu0 0.0
    %156 = vmatmul.mubr.f32.gmra.mxu0 %v65
    %v157 = vpop.f32.mrf.mxu0
    %v158 = vadd.f32 %v89, %v157
    %v159 = vpop.f32.mrf.mxu0
    %160 = vdwg.mxu0
    %161 = vst [vmem:[#allocation2] sm:$0x3] %v158
    // Predicated region
    $region14: #{classifier_forward.1} parent=1 // pred_check
      _
    $region15: #{classifier_forward.1} parent=1 // pred_check_branch
      %163 = sbr.rel (0) target = $region17
    $region16: #{classifier_forward.1} parent=1 // pred_region
      %s165 = ssub.s32 32, 32
      %166 = vsyncadd [#allocation3], %s165
      %s168 = sshll.u32 [#allocation2], 4
      %s169 = int_to_ptr.vmem [resolvable:$true] %s168
      %171 = dma.vmem_to_hbm [thread:$0]  %s169, 32, %s3, [#allocation3]
    $region17: #{classifier_forward.1} parent=1 // pred_fallthru
      _
    // Predicated region
    $region18: #{classifier_forward.1} parent=1 // pred_check
      _
    $region19: #{classifier_forward.1} parent=1 // pred_check_branch
      %173 = sbr.rel (0) target = $region21
    $region20: #{classifier_forward.1} parent=1 // pred_region
      %s175 = ssub.s32 32, 32
      %176 = vsyncadd [#allocation5], %s175
      %s178 = sshll.u32 [#allocation4], 4
      %s179 = int_to_ptr.vmem [resolvable:$true] %s178
      %181 = dma.vmem_to_hbm [thread:$0]  %s179, 32, %s4, [#allocation5]
    $region21: #{classifier_forward.1} parent=1 // pred_fallthru
      _
    // Predicated region
    $region22: #{classifier_forward.1} parent=1 // pred_check
      _
    $region23: #{classifier_forward.1} parent=1 // pred_check_branch
      %183 = sbr.rel (0) target = $region25
    $region24: #{classifier_forward.1} parent=1 // pred_region
      %184 = dma.done [#allocation3], 32
    $region25: #{classifier_forward.1} parent=1 // pred_fallthru
      _
    // Predicated region
    $region26: #{classifier_forward.1} parent=1 // pred_check
      _
    $region27: #{classifier_forward.1} parent=1 // pred_check_branch
      %186 = sbr.rel (0) target = $region29
    $region28: #{classifier_forward.1} parent=1 // pred_region
      %187 = dma.done [#allocation5], 32
    $region29: #{classifier_forward.1} parent=1 // pred_fallthru
      _
    %188 = vsyncpa [#allocation3], 1
    %189 = vsyncpa [#allocation5], 1

</llo_original>
